<compile_context>
chip_gen: v5e
topology: v5e:2x2
jax: 0.10.0
libtpu: 0.0.40
codegen_flags: <defaults>
</compile_context>

<pallas_src>
import functools

import jax
import jax.numpy as jnp
from jax.experimental import pallas as pl
from jax.experimental.pallas import tpu as pltpu

IN_FEATURES = 300
NUM_CLASSES = 10
BATCH = 8

LANE = 128      # lane width (last dim) for f32 vregs
SUBLANE = 8     # sublane height (second-to-last dim) for f32 vregs


def _round_up(x, m):
    return (x + m - 1) // m * m


def linear_kernel(x_ref, w_ref, o_ref):
    # Single MXU matmul over lane-dense padded operands.  Bias is already folded
    # into w (row IN_FEATURES, matched by a ones column in x), so there is no
    # separate bias DMA or VPU add.
    o_ref[...] = jnp.dot(
        x_ref[...], w_ref[...], preferred_element_type=jnp.float32
    ).astype(o_ref.dtype)


def make_classifier_params(weight, bias):
    """Pack PyTorch-style weight (C, K) and bias (C,) into one lane-dense
    (K_pad, C_pad) f32 matrix, with the bias folded in as row K."""
    C, K = weight.shape
    k_pad = _round_up(K + 1, LANE)   # +1 row for the folded bias -> 384
    c_pad = _round_up(C, LANE)       # -> 128
    w = jnp.zeros((k_pad, c_pad), jnp.float32)
    w = w.at[:K, :C].set(weight.T.astype(jnp.float32))
    w = w.at[K, :C].set(bias.astype(jnp.float32))
    return w


@functools.partial(jax.jit, static_argnums=(2,))
def classifier_forward(x, w_packed, num_classes):
    """x: (B, 300) f32, w_packed: (384, 128) f32 -> (B, num_classes) f32.
    Identical math to PyTorch's x @ weight.T + bias."""
    B, K = x.shape
    k_pad, c_pad = w_packed.shape
    b_pad = _round_up(max(B, SUBLANE), SUBLANE)

    # Pad x to (b_pad, k_pad): real features, then a ones column (bias hook), zeros.
    x_pad = jnp.zeros((b_pad, k_pad), jnp.float32)
    x_pad = x_pad.at[:B, :K].set(x.astype(jnp.float32))
    x_pad = x_pad.at[:B, K].set(1.0)

    out = pl.pallas_call(
        linear_kernel,
        out_shape=jax.ShapeDtypeStruct((b_pad, c_pad), jnp.float32),
        in_specs=[
            pl.BlockSpec(memory_space=pltpu.MemorySpace.VMEM),
            pl.BlockSpec(memory_space=pltpu.MemorySpace.VMEM),
        ],
        out_specs=pl.BlockSpec(memory_space=pltpu.MemorySpace.VMEM),
    )(x_pad, w_packed)

    return out[:B, :num_classes]


if __name__ == "__main__":
    key = jax.random.PRNGKey(0)
    k_x, k_w, k_b = jax.random.split(key, 3)

    # Deterministic parameter init mimicking nn.Linear's U(-1/sqrt(fan_in), 1/sqrt(fan_in)).
    bound = 1.0 / (IN_FEATURES ** 0.5)
    weight = jax.random.uniform(k_w, (NUM_CLASSES, IN_FEATURES),
                                minval=-bound, maxval=bound, dtype=jnp.float32)
    bias = jax.random.uniform(k_b, (NUM_CLASSES,),
                              minval=-bound, maxval=bound, dtype=jnp.float32)

    x = jax.random.normal(k_x, (BATCH, IN_FEATURES), dtype=jnp.float32)

    # One-time host-side packing of (weight, bias) into the lane-dense matrix.
    w_packed = make_classifier_params(weight, bias)

    out = classifier_forward(x, w_packed, NUM_CLASSES)
    out = jax.block_until_ready(out)

    # Reference check against plain JAX (same math as PyTorch Linear).
    ref = x @ weight.T + bias
    assert out.shape == (BATCH, NUM_CLASSES)
    assert jnp.allclose(out, ref, atol=1e-4, rtol=1e-4)

    print("KERNEL_OK")
</pallas_src>

<mosaic_0001>
module attributes {stable_mosaic.version = 11 : i64} {
  func.func @linear_kernel(%arg0: memref<8x384xf32, #tpu.memory_space<vmem>>, %arg1: memref<384x128xf32, #tpu.memory_space<vmem>>, %arg2: memref<8x128xf32, #tpu.memory_space<vmem>>) attributes {dimension_semantics = [], scalar_prefetch = 0 : i64, scratch_operands = 0 : i64, tpu.core_type = #tpu.core_type<tc>} {
    %c0 = arith.constant 0 : index
    %c0_0 = arith.constant 0 : index
    %0 = vector.load %arg0[%c0, %c0_0] : memref<8x384xf32, #tpu.memory_space<vmem>>, vector<8x384xf32>
    %c0_1 = arith.constant 0 : index
    %c0_2 = arith.constant 0 : index
    %1 = vector.load %arg1[%c0_1, %c0_2] : memref<384x128xf32, #tpu.memory_space<vmem>>, vector<384x128xf32>
    %cst = arith.constant dense<0.000000e+00> : vector<8x128xf32>
    %2 = tpu.matmul %0, %1, %cst {dimension_numbers = #tpu.dot_dimension_numbers<[1], [0], [0], [1], [0, 0, 1, 1], [], []>} : vector<8x384xf32>, vector<384x128xf32>, vector<8x128xf32> -> vector<8x128xf32>
    %c0_3 = arith.constant 0 : index
    %c0_4 = arith.constant 0 : index
    %3 = vector.load %arg2[%c0_3, %c0_4] : memref<8x128xf32, #tpu.memory_space<vmem>>, vector<8x128xf32>
    tpu.vector_store %arg2[%c0_3, %c0_4], %2 {strides = array<i32>} : memref<8x128xf32, #tpu.memory_space<vmem>>, vector<8x128xf32>,
    return
  }
}

</mosaic_0001>

<llo_original>
// kernel: classifier_forward.1
$region0: #{classifier_forward.1}
  #allocation0 [shape = 'u32[]', space=smem, size = 0x4, offset = 0x4, fixed_abs, tag = 'smem constant byte address 0x4 - core index']
  #allocation1 [shape = 'u32[72,128]{1,0:T(1,128)}', space=vmem, size = 0x9000, scoped, tag = 'internal scratch']
  %s0 = inlined_call_operand.vmem [shape: f32[8,384], index: 0, kind: input, shape index: {}]
  %s1 = inlined_call_operand.hbm [shape: f32[384,128], index: 1, kind: input, shape index: {}]
  %s2 = inlined_call_operand.hbm [shape: f32[8,128], index: 2, kind: output, shape index: {}]
  %s3 = sld [smem:[#allocation0]]
  $region22: #{classifier_forward.1} parent=0
    _
  %s5 = ssub.s32 1, %s3
  %s6 = scalar_select 0, %s5, %s3
  $region1: #{classifier_forward.1} parent=0
    #allocation2 [shape = 'u8[196608]{0}', space=vmem, size = 0x30000, scoped, tag = 'input window, operand 1, single buffered']
    #allocation3 [shape = 's32[1]{0}', space=sflag, size = 0x4, scoped, tag = 'scoped memory for classifier_forward.1']
    #allocation4 [shape = 's32[1]{0}', space=sflag, size = 0x4, scoped, tag = 'scoped memory for classifier_forward.1']
    #allocation5 [shape = 'u8[4096]{0}', space=vmem, size = 0x1000, scoped, tag = 'output window, operand 0, single buffered']
    %7 = vsyncpa [#allocation3], 0
    %8 = vsyncpa [#allocation4], 0
    // Predicated region
    $region2: #{classifier_forward.1} parent=1 // pred_check
      _
    $region3: #{classifier_forward.1} parent=1 // pred_check_branch
      %10 = sbr.rel (0) target = $region5
    $region4: #{classifier_forward.1} parent=1 // pred_region
      _
    $region5: #{classifier_forward.1} parent=1 // pred_fallthru
      _
    // Predicated region
    $region6: #{classifier_forward.1} parent=1 // pred_check
      _
    $region7: #{classifier_forward.1} parent=1 // pred_check_branch
      %12 = sbr.rel (0) target = $region9
    $region8: #{classifier_forward.1} parent=1 // pred_region
      %14 = vsyncadd [#allocation3], 0
      %s15 = sshll.u32 %s1, 4
      %s16 = int_to_ptr.hbm [resolvable:$true] %s15
      %s17 = sshll.u32 [#allocation2], 4
      %s18 = int_to_ptr.vmem [resolvable:$true] %s17
      %23 = dma.hbm_to_vmem [thread:$0]  %s16, 6144, %s18, [#allocation3], 128, 128, 8
    $region9: #{classifier_forward.1} parent=1 // pred_fallthru
      _
    // Predicated region
    $region10: #{classifier_forward.1} parent=1 // pred_check
      _
    $region11: #{classifier_forward.1} parent=1 // pred_check_branch
      %25 = sbr.rel (0) target = $region13
    $region12: #{classifier_forward.1} parent=1 // pred_region
      %27 = dma.done [#allocation3], 6144
    $region13: #{classifier_forward.1} parent=1 // pred_fallthru
      _
    %v28 = vld [vmem:[%s0] sm:$0xff]
    %v29 = vld [vmem:[%s0 + $0x8] sm:$0xff]
    %v30 = vld [vmem:[%s0 + $0x10] sm:$0xff]
    %v31 = vld [vmem:[#allocation2] sm:$0xff]
    %v32 = vld [vmem:[#allocation2 + $0x8] sm:$0xff]
    %v33 = vld [vmem:[#allocation2 + $0x10] sm:$0xff]
    %v34 = vld [vmem:[#allocation2 + $0x18] sm:$0xff]
    %v35 = vld [vmem:[#allocation2 + $0x20] sm:$0xff]
    %v36 = vld [vmem:[#allocation2 + $0x28] sm:$0xff]
    %v37 = vld [vmem:[#allocation2 + $0x30] sm:$0xff]
    %v38 = vld [vmem:[#allocation2 + $0x38] sm:$0xff]
    %v39 = vld [vmem:[#allocation2 + $0x40] sm:$0xff]
    %v40 = vld [vmem:[#allocation2 + $0x48] sm:$0xff]
    %v41 = vld [vmem:[#allocation2 + $0x50] sm:$0xff]
    %v42 = vld [vmem:[#allocation2 + $0x58] sm:$0xff]
    %v43 = vld [vmem:[#allocation2 + $0x60] sm:$0xff]
    %v44 = vld [vmem:[#allocation2 + $0x68] sm:$0xff]
    %v45 = vld [vmem:[#allocation2 + $0x70] sm:$0xff]
    %v46 = vld [vmem:[#allocation2 + $0x78] sm:$0xff]
    %v47 = vld [vmem:[#allocation2 + $0x80] sm:$0xff]
    %v48 = vld [vmem:[#allocation2 + $0x88] sm:$0xff]
    %v49 = vld [vmem:[#allocation2 + $0x90] sm:$0xff]
    %v50 = vld [vmem:[#allocation2 + $0x98] sm:$0xff]
    %v51 = vld [vmem:[#allocation2 + $0xa0] sm:$0xff]
    %v52 = vld [vmem:[#allocation2 + $0xa8] sm:$0xff]
    %v53 = vld [vmem:[#allocation2 + $0xb0] sm:$0xff]
    %v54 = vld [vmem:[#allocation2 + $0xb8] sm:$0xff]
    %v55 = vld [vmem:[#allocation2 + $0xc0] sm:$0xff]
    %v56 = vld [vmem:[#allocation2 + $0xc8] sm:$0xff]
    %v57 = vld [vmem:[#allocation2 + $0xd0] sm:$0xff]
    %v58 = vld [vmem:[#allocation2 + $0xd8] sm:$0xff]
    %v59 = vld [vmem:[#allocation2 + $0xe0] sm:$0xff]
    %v60 = vld [vmem:[#allocation2 + $0xe8] sm:$0xff]
    %v61 = vld [vmem:[#allocation2 + $0xf0] sm:$0xff]
    %v62 = vld [vmem:[#allocation2 + $0xf8] sm:$0xff]
    %v63 = vld [vmem:[#allocation2 + $0x100] sm:$0xff]
    %v64 = vld [vmem:[#allocation2 + $0x108] sm:$0xff]
    %v65 = vld [vmem:[#allocation2 + $0x110] sm:$0xff]
    %v66 = vld [vmem:[#allocation2 + $0x118] sm:$0xff]
    %v67 = vld [vmem:[#allocation2 + $0x120] sm:$0xff]
    %v68 = vld [vmem:[#allocation2 + $0x128] sm:$0xff]
    %v69 = vld [vmem:[#allocation2 + $0x130] sm:$0xff]
    %v70 = vld [vmem:[#allocation2 + $0x138] sm:$0xff]
    %v71 = vld [vmem:[#allocation2 + $0x140] sm:$0xff]
    %v72 = vld [vmem:[#allocation2 + $0x148] sm:$0xff]
    %v73 = vld [vmem:[#allocation2 + $0x150] sm:$0xff]
    %v74 = vld [vmem:[#allocation2 + $0x158] sm:$0xff]
    %v75 = vld [vmem:[#allocation2 + $0x160] sm:$0xff]
    %v76 = vld [vmem:[#allocation2 + $0x168] sm:$0xff]
    %v77 = vld [vmem:[#allocation2 + $0x170] sm:$0xff]
    %v78 = vld [vmem:[#allocation2 + $0x178] sm:$0xff]
    %79 = vmatpush.msra.mxu0 %v46
    %80 = vmatpush.msra.mxu0 %v45
    %81 = vmatpush.msra.mxu0 %v44
    %82 = vmatpush.msra.mxu0 %v43
    %83 = vmatpush.msra.mxu0 %v42
    %84 = vmatpush.msra.mxu0 %v41
    %85 = vmatpush.msra.mxu0 %v40
    %86 = vmatpush.msra.mxu0 %v39
    %87 = vmatpush.msra.mxu0 %v38
    %88 = vmatpush.msra.mxu0 %v37
    %89 = vmatpush.msra.mxu0 %v36
    %90 = vmatpush.msra.mxu0 %v35
    %91 = vmatpush.msra.mxu0 %v34
    %92 = vmatpush.msra.mxu0 %v33
    %93 = vmatpush.msra.mxu0 %v32
    %94 = vmatpush.msra.mxu0 %v31
    %95 = vmatmul.f32.gmra.mxu0 %v28
    %v96 = vpop.f32.mrf.mxu0
    %v97 = vadd.f32 0.0, %v96
    %98 = vdwg.mxu0
    %99 = vmatpush.msra.mxu0 %v62
    %100 = vmatpush.msra.mxu0 %v61
    %101 = vmatpush.msra.mxu0 %v60
    %102 = vmatpush.msra.mxu0 %v59
    %103 = vmatpush.msra.mxu0 %v58
    %104 = vmatpush.msra.mxu0 %v57
    %105 = vmatpush.msra.mxu0 %v56
    %106 = vmatpush.msra.mxu0 %v55
    %107 = vmatpush.msra.mxu0 %v54
    %108 = vmatpush.msra.mxu0 %v53
    %109 = vmatpush.msra.mxu0 %v52
    %110 = vmatpush.msra.mxu0 %v51
    %111 = vmatpush.msra.mxu0 %v50
    %112 = vmatpush.msra.mxu0 %v49
    %113 = vmatpush.msra.mxu0 %v48
    %114 = vmatpush.msra.mxu0 %v47
    %115 = vmatmul.f32.gmra.mxu0 %v29
    %v116 = vpop.f32.mrf.mxu0
    %v117 = vadd.f32 %v97, %v116
    %118 = vdwg.mxu0
    %119 = vmatpush.msra.mxu0 %v78
    %120 = vmatpush.msra.mxu0 %v77
    %121 = vmatpush.msra.mxu0 %v76
    %122 = vmatpush.msra.mxu0 %v75
    %123 = vmatpush.msra.mxu0 %v74
    %124 = vmatpush.msra.mxu0 %v73
    %125 = vmatpush.msra.mxu0 %v72
    %126 = vmatpush.msra.mxu0 %v71
    %127 = vmatpush.msra.mxu0 %v70
    %128 = vmatpush.msra.mxu0 %v69
    %129 = vmatpush.msra.mxu0 %v68
    %130 = vmatpush.msra.mxu0 %v67
    %131 = vmatpush.msra.mxu0 %v66
    %132 = vmatpush.msra.mxu0 %v65
    %133 = vmatpush.msra.mxu0 %v64
    %134 = vmatpush.msra.mxu0 %v63
    %135 = vmatmul.f32.gmra.mxu0 %v30
    %v136 = vpop.f32.mrf.mxu0
    %v137 = vadd.f32 %v117, %v136
    %138 = vdwg.mxu0
    %139 = vst [vmem:[#allocation5] sm:$0xff] %v137
    // Predicated region
    $region14: #{classifier_forward.1} parent=1 // pred_check
      _
    $region15: #{classifier_forward.1} parent=1 // pred_check_branch
      %141 = sbr.rel (0) target = $region17
    $region16: #{classifier_forward.1} parent=1 // pred_region
      %143 = vsyncadd [#allocation4], 0
      %s145 = sshll.u32 [#allocation5], 4
      %s146 = int_to_ptr.vmem [resolvable:$true] %s145
      %s147 = sshll.u32 %s2, 4
      %s148 = int_to_ptr.hbm [resolvable:$true] %s147
      %150 = dma.vmem_to_hbm [thread:$0]  %s146, 128, %s148, [#allocation4]
    $region17: #{classifier_forward.1} parent=1 // pred_fallthru
      _
    // Predicated region
    $region18: #{classifier_forward.1} parent=1 // pred_check
      _
    $region19: #{classifier_forward.1} parent=1 // pred_check_branch
      %152 = sbr.rel (0) target = $region21
    $region20: #{classifier_forward.1} parent=1 // pred_region
      %154 = dma.done [#allocation4], 128
    $region21: #{classifier_forward.1} parent=1 // pred_fallthru
      _
    %155 = vsyncpa [#allocation3], 1
    %156 = vsyncpa [#allocation4], 1

</llo_original>
